<compile_context>
chip_gen: v5e
topology: v5e:2x2
jax: 0.10.0
libtpu: 0.0.40
codegen_flags: <defaults>
</compile_context>

<pallas_src>
import jax
import jax.numpy as jnp
from jax.experimental import pallas as pl
from jax.experimental.pallas import tpu as pltpu

_LANES = 128
_NEG_BIG = -1e30      # "-inf" for padded softmax columns (finite: avoids inf-inf)
_MAX_TB = 1024        # single grid step up to this many (padded) rows
_B_BUCKETS = (8, 256, 1024)   # fixed padded batch sizes -> no per-length recompiles


def _round_up(n, m):
    return ((n + m - 1) // m) * m


def _bucket_batch(b):
    for s in _B_BUCKETS:
        if b <= s:
            return s
    return _round_up(b, _MAX_TB)


def prepare_params(w1, b1, w2, b2):
    """One-time parameter prep (call once, outside the RL step loop).

    w1: (nin, hidden), b1: (hidden,)/(1,hidden), w2: (hidden, nout), b2: (nout,)/(1,nout)
    (weights already stored transposed vs. nn.Linear, i.e. y = x @ w + b).
    """
    nin, hidden = w1.shape
    nout = w2.shape[1]
    nin_pad = _round_up(max(nin, _LANES), _LANES)
    nout_pad = _round_up(max(nout, _LANES), _LANES)

    # Lane-dense, bf16 MXU operands. Zero-padded W1 rows / W2 cols keep the
    # matmuls exact; -1e30 padded b2 entries make padded softmax columns ~0.
    w1p = jnp.zeros((nin_pad, hidden), jnp.bfloat16).at[:nin, :].set(
        w1.astype(jnp.bfloat16))
    b1p = b1.astype(jnp.float32).reshape(1, hidden)
    w2p = jnp.zeros((hidden, nout_pad), jnp.bfloat16).at[:, :nout].set(
        w2.astype(jnp.bfloat16))
    b2p = jnp.full((1, nout_pad), _NEG_BIG, jnp.float32).at[:, :nout].set(
        b2.astype(jnp.float32).reshape(1, nout))

    return dict(w1=w1p, b1=b1p, w2=w2p, b2=b2p,
                nin=nin, nout=nout, nin_pad=nin_pad, nout_pad=nout_pad,
                hidden=hidden)


def policy1_kernel(x_ref, w1_ref, b1_ref, w2_ref, b2_ref, out_ref):
    # fc1 + ReLU: bf16 MXU operands, f32 accumulation & elementwise math.
    x = x_ref[...].astype(jnp.bfloat16)                         # (TB, 128)
    h = jnp.dot(x, w1_ref[...],
                preferred_element_type=jnp.float32) + b1_ref[...]
    h = jnp.maximum(h, 0.0)                                      # (TB, 128) f32
    # fc2 on a lane-dense padded output slab (padded b2 entries ~= -inf).
    scores = jnp.dot(h.astype(jnp.bfloat16), w2_ref[...],
                     preferred_element_type=jnp.float32) + b2_ref[...]
    # Numerically stable softmax over dim=1; padded columns exp to ~0.
    m = jnp.max(scores, axis=1, keepdims=True)
    e = jnp.exp(scores - m)
    denom = jnp.sum(e, axis=1, keepdims=True)
    # Exact divide (REINFORCE takes log-probs downstream; divide is free here).
    out_ref[...] = e / denom


def policy1_forward_padded(x, params):
    """Hot-path forward: returns the padded (b_pad, 128) probability slab.

    Real probabilities live in rows 0..B-1, lanes 0..nout-1; padded lanes are ~0.
    """
    B, nin = x.shape
    assert nin == params["nin"], "input feature dim mismatch with prepared params"
    hidden = params["hidden"]
    nin_pad, nout_pad = params["nin_pad"], params["nout_pad"]

    # Fixed-bucket batch padding (keeps compile cache hot) + lane-dense nin pad.
    b_pad = _bucket_batch(max(B, 1))
    xp = jnp.pad(x, ((0, b_pad - B), (0, nin_pad - nin)))

    # Single grid step for realistic batches; tile only when b_pad > _MAX_TB.
    tb = min(b_pad, _MAX_TB)
    grid = (b_pad // tb,)

    flops = 2 * b_pad * (nin_pad * hidden + hidden * nout_pad)
    bytes_accessed = (4 * b_pad * (nin_pad + nout_pad)          # x in, probs out (f32)
                      + 2 * (nin_pad * hidden + hidden * nout_pad)  # bf16 weights
                      + 4 * (hidden + nout_pad))                # f32 biases
    cost = pl.CostEstimate(flops=flops,
                           transcendentals=b_pad * nout_pad,    # exp over padded lanes
                           bytes_accessed=bytes_accessed)

    out = pl.pallas_call(
        policy1_kernel,
        out_shape=jax.ShapeDtypeStruct((b_pad, nout_pad), jnp.float32),
        grid=grid,
        in_specs=[
            pl.BlockSpec((tb, nin_pad), lambda i: (i, 0)),        # x: streamed per tile
            pl.BlockSpec((nin_pad, hidden), lambda i: (0, 0)),    # W1 resident (bf16)
            pl.BlockSpec((1, hidden), lambda i: (0, 0)),          # b1 resident
            pl.BlockSpec((hidden, nout_pad), lambda i: (0, 0)),   # W2 resident (bf16)
            pl.BlockSpec((1, nout_pad), lambda i: (0, 0)),        # b2 resident
        ],
        out_specs=pl.BlockSpec((tb, nout_pad), lambda i: (i, 0)),
        compiler_params=pltpu.CompilerParams(
            # Only matters when grid > 1 (b_pad > 1024); small batches are a
            # 1-step single-TC launch, so megacore never duplicates work.
            dimension_semantics=("parallel",),
        ),
        cost_estimate=cost,
    )(xp, params["w1"], params["b1"], params["w2"], params["b2"])

    return out  # (b_pad, nout_pad)


def policy1_forward(x, params):
    """Convenience wrapper with exact nn.Module output shape (B, nout)."""
    out = policy1_forward_padded(x, params)
    return out[:x.shape[0], :params["nout"]]


def policy1_ref(x, w1, b1, w2, b2):
    """Pure-JAX f32 reference for correctness checks."""
    h = jnp.maximum(x @ w1 + b1.reshape(1, -1), 0.0)
    return jax.nn.softmax(h @ w2 + b2.reshape(1, -1), axis=1)


def init_params(key, ninputs, noutputs, hidden=128):
    """Deterministic init mimicking nn.Linear default (uniform +-1/sqrt(fan_in))."""
    k1, k2, k3, k4 = jax.random.split(key, 4)
    bound1 = 1.0 / jnp.sqrt(jnp.float32(ninputs))
    bound2 = 1.0 / jnp.sqrt(jnp.float32(hidden))
    w1 = jax.random.uniform(k1, (ninputs, hidden), jnp.float32, -bound1, bound1)
    b1 = jax.random.uniform(k2, (1, hidden), jnp.float32, -bound1, bound1)
    w2 = jax.random.uniform(k3, (hidden, noutputs), jnp.float32, -bound2, bound2)
    b2 = jax.random.uniform(k4, (1, noutputs), jnp.float32, -bound2, bound2)
    return w1, b1, w2, b2

# TODO(synk): select_action (Categorical sampling) and the REINFORCE / Adam
# update loop are host-side training logic, not part of the forward pass.


if __name__ == "__main__":
    # CartPole-v1: observation dim = 4, actions = 2, hidden = 128.
    ninputs, noutputs = 4, 2
    key = jax.random.PRNGKey(0)
    kx1, kx2, kp = jax.random.split(key, 3)
    w1, b1, w2, b2 = init_params(kp, ninputs, noutputs)

    # One-time parameter prep (pad + bf16 cast) outside the step loop.
    params = prepare_params(w1, b1, w2, b2)
    jax.block_until_ready(params)

    # Single-state rollout call (select_action style): bucket 8, 1 grid step.
    x_small = jax.random.normal(kx1, (1, ninputs), jnp.float32)
    probs_small_pad = policy1_forward_padded(x_small, params)
    jax.block_until_ready(probs_small_pad)

    # Larger ragged batch: buckets to 1024 rows, still a single grid step.
    x_big = jax.random.normal(kx2, (260, ninputs), jnp.float32)
    probs_big_pad = policy1_forward_padded(x_big, params)
    jax.block_until_ready(probs_big_pad)

    for x, probs_pad in ((x_small, probs_small_pad), (x_big, probs_big_pad)):
        B = x.shape[0]
        probs = probs_pad[:B, :noutputs]          # check-only slice (off hot path)
        ref = policy1_ref(x, w1, b1, w2, b2)
        assert probs.shape == (B, noutputs)
        assert jnp.allclose(jnp.sum(probs_pad[:B], axis=1), 1.0, atol=1e-4)
        assert jnp.allclose(probs, ref, rtol=2e-2, atol=5e-3), (
            float(jnp.max(jnp.abs(probs - ref))))

    print("KERNEL_OK")
</pallas_src>

<mosaic_0001>
module attributes {stable_mosaic.version = 11 : i64} {
  func.func @policy1_kernel(%arg0: i32, %arg1: memref<8x128xf32, #tpu.memory_space<vmem>>, %arg2: memref<128x128xbf16, #tpu.memory_space<vmem>>, %arg3: memref<1x128xf32, #tpu.memory_space<vmem>>, %arg4: memref<128x128xbf16, #tpu.memory_space<vmem>>, %arg5: memref<1x128xf32, #tpu.memory_space<vmem>>, %arg6: memref<8x128xf32, #tpu.memory_space<vmem>>) attributes {dimension_semantics = [#tpu.dimension_semantics<parallel>], iteration_bounds = array<i64: 1>, scalar_prefetch = 0 : i64, scratch_operands = 0 : i64, tpu.core_type = #tpu.core_type<tc>, window_params = [{transform_indices = @transform_0, window_bounds = array<i64: 8, 128>}, {pipeline_mode = #tpu.pipeline_mode<synchronous>, transform_indices = @transform_1, window_bounds = array<i64: 128, 128>}, {pipeline_mode = #tpu.pipeline_mode<synchronous>, transform_indices = @transform_2, window_bounds = array<i64: 1, 128>}, {pipeline_mode = #tpu.pipeline_mode<synchronous>, transform_indices = @transform_3, window_bounds = array<i64: 128, 128>}, {pipeline_mode = #tpu.pipeline_mode<synchronous>, transform_indices = @transform_4, window_bounds = array<i64: 1, 128>}, {transform_indices = @transform_5, window_bounds = array<i64: 8, 128>}]} {
    %c0 = arith.constant 0 : index
    %c0_0 = arith.constant 0 : index
    %0 = vector.load %arg1[%c0, %c0_0] : memref<8x128xf32, #tpu.memory_space<vmem>>, vector<8x128xf32>
    %1 = arith.truncf %0 : vector<8x128xf32> to vector<8x128xbf16>
    %c0_1 = arith.constant 0 : index
    %c0_2 = arith.constant 0 : index
    %2 = vector.load %arg2[%c0_1, %c0_2] : memref<128x128xbf16, #tpu.memory_space<vmem>>, vector<128x128xbf16>
    %cst = arith.constant dense<0.000000e+00> : vector<8x128xf32>
    %3 = tpu.matmul %1, %2, %cst {dimension_numbers = #tpu.dot_dimension_numbers<[1], [0], [0], [1], [0, 0, 1, 1], [], []>} : vector<8x128xbf16>, vector<128x128xbf16>, vector<8x128xf32> -> vector<8x128xf32>
    %c0_3 = arith.constant 0 : index
    %c0_4 = arith.constant 0 : index
    %4 = vector.load %arg3[%c0_3, %c0_4] : memref<1x128xf32, #tpu.memory_space<vmem>>, vector<1x128xf32>
    %5 = vector.broadcast %4 : vector<1x128xf32> to vector<8x128xf32>
    %6 = arith.addf %3, %5 : vector<8x128xf32>
    %cst_5 = arith.constant 0.000000e+00 : f32
    %7 = vector.broadcast %cst_5 : f32 to vector<8x128xf32>
    %8 = arith.maximumf %6, %7 : vector<8x128xf32>
    %9 = arith.truncf %8 : vector<8x128xf32> to vector<8x128xbf16>
    %c0_6 = arith.constant 0 : index
    %c0_7 = arith.constant 0 : index
    %10 = vector.load %arg4[%c0_6, %c0_7] : memref<128x128xbf16, #tpu.memory_space<vmem>>, vector<128x128xbf16>
    %cst_8 = arith.constant dense<0.000000e+00> : vector<8x128xf32>
    %11 = tpu.matmul %9, %10, %cst_8 {dimension_numbers = #tpu.dot_dimension_numbers<[1], [0], [0], [1], [0, 0, 1, 1], [], []>} : vector<8x128xbf16>, vector<128x128xbf16>, vector<8x128xf32> -> vector<8x128xf32>
    %c0_9 = arith.constant 0 : index
    %c0_10 = arith.constant 0 : index
    %12 = vector.load %arg5[%c0_9, %c0_10] : memref<1x128xf32, #tpu.memory_space<vmem>>, vector<1x128xf32>
    %13 = vector.broadcast %12 : vector<1x128xf32> to vector<8x128xf32>
    %14 = arith.addf %11, %13 : vector<8x128xf32>
    %cst_11 = arith.constant dense<0xFF800000> : vector<8xf32>
    %15 = vector.multi_reduction <maximumf>, %14, %cst_11 [1] : vector<8x128xf32> to vector<8xf32>
    %16 = vector.shape_cast %15 : vector<8xf32> to vector<8x1xf32>
    %17 = vector.broadcast %16 : vector<8x1xf32> to vector<8x128xf32>
    %18 = arith.subf %14, %17 : vector<8x128xf32>
    %19 = math.exp %18 : vector<8x128xf32>
    %cst_12 = arith.constant dense<0.000000e+00> : vector<8xf32>
    %20 = vector.multi_reduction <add>, %19, %cst_12 [1] : vector<8x128xf32> to vector<8xf32>
    %21 = vector.shape_cast %20 : vector<8xf32> to vector<8x1xf32>
    %22 = vector.broadcast %21 : vector<8x1xf32> to vector<8x128xf32>
    %23 = arith.divf %19, %22 : vector<8x128xf32>
    %c0_13 = arith.constant 0 : index
    %c0_14 = arith.constant 0 : index
    %24 = vector.load %arg6[%c0_13, %c0_14] : memref<8x128xf32, #tpu.memory_space<vmem>>, vector<8x128xf32>
    tpu.vector_store %arg6[%c0_13, %c0_14], %23 {strides = array<i32>} : memref<8x128xf32, #tpu.memory_space<vmem>>, vector<8x128xf32>,
    return
  }
  func.func @transform_0(%arg0: i32) -> (i32, i32) {
    %c0_i32 = arith.constant 0 : i32
    %c0_i32_0 = arith.constant 0 : i32
    return %arg0, %c0_i32 : i32, i32
  }
  func.func @transform_1(%arg0: i32) -> (i32, i32) {
    %c0_i32 = arith.constant 0 : i32
    %c0_i32_0 = arith.constant 0 : i32
    %c0_i32_1 = arith.constant 0 : i32
    return %c0_i32, %c0_i32_0 : i32, i32
  }
  func.func @transform_2(%arg0: i32) -> (i32, i32) {
    %c0_i32 = arith.constant 0 : i32
    %c0_i32_0 = arith.constant 0 : i32
    %c0_i32_1 = arith.constant 0 : i32
    return %c0_i32, %c0_i32_0 : i32, i32
  }
  func.func @transform_3(%arg0: i32) -> (i32, i32) {
    %c0_i32 = arith.constant 0 : i32
    %c0_i32_0 = arith.constant 0 : i32
    %c0_i32_1 = arith.constant 0 : i32
    return %c0_i32, %c0_i32_0 : i32, i32
  }
  func.func @transform_4(%arg0: i32) -> (i32, i32) {
    %c0_i32 = arith.constant 0 : i32
    %c0_i32_0 = arith.constant 0 : i32
    %c0_i32_1 = arith.constant 0 : i32
    return %c0_i32, %c0_i32_0 : i32, i32
  }
  func.func @transform_5(%arg0: i32) -> (i32, i32) {
    %c0_i32 = arith.constant 0 : i32
    %c0_i32_0 = arith.constant 0 : i32
    return %arg0, %c0_i32 : i32, i32
  }
}

</mosaic_0001>

<llo_original>
// kernel: tpu_custom_call.1
$region0: #{tpu_custom_call.1}
  #allocation0 [shape = 'u32[]', space=smem, size = 0x4, offset = 0x4, fixed_abs, tag = 'smem constant byte address 0x4 - core index']
  #allocation1 [shape = 'u32[72,128]{1,0:T(1,128)}', space=vmem, size = 0x9000, scoped, tag = 'internal scratch']
  %s0 = inlined_call_operand.hbm [shape: f32[8,128], index: 0, kind: input, shape index: {}]
  %s1 = inlined_call_operand.hbm [shape: bf16[128,128], index: 1, kind: input, shape index: {}]
  %s2 = inlined_call_operand.vmem [shape: f32[1,128], index: 2, kind: input, shape index: {}]
  %s3 = inlined_call_operand.hbm [shape: bf16[128,128], index: 3, kind: input, shape index: {}]
  %s4 = inlined_call_operand.vmem [shape: f32[1,128], index: 4, kind: input, shape index: {}]
  %s5 = inlined_call_operand.hbm [shape: f32[8,128], index: 5, kind: output, shape index: {}]
  %s6 = sld [smem:[#allocation0]]
  $region42: #{tpu_custom_call.1} parent=0
    _
  %s8 = ssub.s32 1, %s6
  %s9 = scalar_select 0, %s8, %s6
  $region1: #{tpu_custom_call.1} parent=0
    #allocation2 [shape = 'u8[4096]{0}', space=vmem, size = 0x1000, scoped, tag = 'input window, operand 0, single buffered']
    #allocation3 [shape = 's32[1]{0}', space=sflag, size = 0x4, scoped, tag = 'scoped memory for tpu_custom_call.1']
    #allocation4 [shape = 's32[1]{0}', space=sflag, size = 0x4, scoped, tag = 'scoped memory for tpu_custom_call.1']
    #allocation5 [shape = 'u8[32768]{0}', space=vmem, size = 0x8000, scoped, tag = 'input window, operand 1, single buffered']
    #allocation6 [shape = 's32[1]{0}', space=sflag, size = 0x4, scoped, tag = 'scoped memory for tpu_custom_call.1']
    #allocation7 [shape = 'u8[32768]{0}', space=vmem, size = 0x8000, scoped, tag = 'input window, operand 3, single buffered']
    #allocation8 [shape = 'u8[4096]{0}', space=vmem, size = 0x1000, scoped, tag = 'output window, operand 0, single buffered']
    %10 = vsyncpa [#allocation3], 0
    %11 = vsyncpa [#allocation6], 0
    %12 = vsyncpa [#allocation4], 0
    // Predicated region
    $region2: #{tpu_custom_call.1} parent=1 // pred_check
      _
    $region3: #{tpu_custom_call.1} parent=1 // pred_check_branch
      %14 = sbr.rel (0) target = $region5
    $region4: #{tpu_custom_call.1} parent=1 // pred_region
      %16 = vsyncadd [#allocation3], 0
      %s18 = sshll.u32 %s0, 4
      %s19 = int_to_ptr.hbm [resolvable:$true] %s18
      %s20 = sshll.u32 [#allocation2], 4
      %s21 = int_to_ptr.vmem [resolvable:$true] %s20
      %23 = dma.hbm_to_vmem [thread:$0]  %s19, 128, %s21, [#allocation3]
    $region5: #{tpu_custom_call.1} parent=1 // pred_fallthru
      _
    // Predicated region
    $region6: #{tpu_custom_call.1} parent=1 // pred_check
      _
    $region7: #{tpu_custom_call.1} parent=1 // pred_check_branch
      %25 = sbr.rel (0) target = $region9
    $region8: #{tpu_custom_call.1} parent=1 // pred_region
      %27 = vsyncadd [#allocation6], 0
      %s28 = sshll.u32 %s1, 4
      %s29 = int_to_ptr.hbm [resolvable:$true] %s28
      %s30 = sshll.u32 [#allocation5], 4
      %s31 = int_to_ptr.vmem [resolvable:$true] %s30
      %36 = dma.hbm_to_vmem [thread:$0]  %s29, 1024, %s31, [#allocation6], 64, 64, 4
    $region9: #{tpu_custom_call.1} parent=1 // pred_fallthru
      _
    // Predicated region
    $region10: #{tpu_custom_call.1} parent=1 // pred_check
      _
    $region11: #{tpu_custom_call.1} parent=1 // pred_check_branch
      %38 = sbr.rel (0) target = $region13
    $region12: #{tpu_custom_call.1} parent=1 // pred_region
      _
    $region13: #{tpu_custom_call.1} parent=1 // pred_fallthru
      _
    // Predicated region
    $region14: #{tpu_custom_call.1} parent=1 // pred_check
      _
    $region15: #{tpu_custom_call.1} parent=1 // pred_check_branch
      %40 = sbr.rel (0) target = $region17
    $region16: #{tpu_custom_call.1} parent=1 // pred_region
      %42 = vsyncadd [#allocation6], 0
      %s43 = sshll.u32 %s3, 4
      %s44 = int_to_ptr.hbm [resolvable:$true] %s43
      %s45 = sshll.u32 [#allocation7], 4
      %s46 = int_to_ptr.vmem [resolvable:$true] %s45
      %51 = dma.hbm_to_vmem [thread:$0]  %s44, 1024, %s46, [#allocation6], 64, 64, 4
    $region17: #{tpu_custom_call.1} parent=1 // pred_fallthru
      _
    // Predicated region
    $region18: #{tpu_custom_call.1} parent=1 // pred_check
      _
    $region19: #{tpu_custom_call.1} parent=1 // pred_check_branch
      %53 = sbr.rel (0) target = $region21
    $region20: #{tpu_custom_call.1} parent=1 // pred_region
      _
    $region21: #{tpu_custom_call.1} parent=1 // pred_fallthru
      _
    // Predicated region
    $region22: #{tpu_custom_call.1} parent=1 // pred_check
      _
    $region23: #{tpu_custom_call.1} parent=1 // pred_check_branch
      %55 = sbr.rel (0) target = $region25
    $region24: #{tpu_custom_call.1} parent=1 // pred_region
      %57 = dma.done [#allocation3], 128
    $region25: #{tpu_custom_call.1} parent=1 // pred_fallthru
      _
    // Predicated region
    $region26: #{tpu_custom_call.1} parent=1 // pred_check
      _
    $region27: #{tpu_custom_call.1} parent=1 // pred_check_branch
      %59 = sbr.rel (0) target = $region29
    $region28: #{tpu_custom_call.1} parent=1 // pred_region
      %61 = dma.done [#allocation6], 1024
    $region29: #{tpu_custom_call.1} parent=1 // pred_fallthru
      _
    // Predicated region
    $region30: #{tpu_custom_call.1} parent=1 // pred_check
      _
    $region31: #{tpu_custom_call.1} parent=1 // pred_check_branch
      %63 = sbr.rel (0) target = $region33
    $region32: #{tpu_custom_call.1} parent=1 // pred_region
      %65 = dma.done [#allocation6], 1024
    $region33: #{tpu_custom_call.1} parent=1 // pred_fallthru
      _
    %v66 = vld [vmem:[#allocation2] sm:$0xff]
    %v67 = vpack.c.bf16 %v66, %v66
    %v68 = vld [vmem:[#allocation5] sm:$0xf]
    %v69 = vld [vmem:[#allocation5 + $0x4] sm:$0xf]
    %v70 = vld [vmem:[#allocation5 + $0x8] sm:$0xf]
    %v71 = vld [vmem:[#allocation5 + $0xc] sm:$0xf]
    %v72 = vld [vmem:[#allocation5 + $0x10] sm:$0xf]
    %v73 = vld [vmem:[#allocation5 + $0x14] sm:$0xf]
    %v74 = vld [vmem:[#allocation5 + $0x18] sm:$0xf]
    %v75 = vld [vmem:[#allocation5 + $0x1c] sm:$0xf]
    %v76 = vld [vmem:[#allocation5 + $0x20] sm:$0xf]
    %v77 = vld [vmem:[#allocation5 + $0x24] sm:$0xf]
    %v78 = vld [vmem:[#allocation5 + $0x28] sm:$0xf]
    %v79 = vld [vmem:[#allocation5 + $0x2c] sm:$0xf]
    %v80 = vld [vmem:[#allocation5 + $0x30] sm:$0xf]
    %v81 = vld [vmem:[#allocation5 + $0x34] sm:$0xf]
    %v82 = vld [vmem:[#allocation5 + $0x38] sm:$0xf]
    %v83 = vld [vmem:[#allocation5 + $0x3c] sm:$0xf]
    %v84 = vld [vmem:[%s2] sm:$0x1]
    %v86 = vperm.slane %v84, 0
    %v104 = vunpack.c.l.b16 %v68
    %v105 = vunpack.c.l.b16 %v69
    %v106 = vunpack.c.l.b16 %v70
    %v107 = vunpack.c.l.b16 %v71
    %v108 = vunpack.c.l.b16 %v72
    %v109 = vunpack.c.l.b16 %v73
    %v110 = vunpack.c.l.b16 %v74
    %v111 = vunpack.c.l.b16 %v75
    %v112 = vunpack.c.l.b16 %v76
    %v113 = vunpack.c.l.b16 %v77
    %v114 = vunpack.c.l.b16 %v78
    %v115 = vunpack.c.l.b16 %v79
    %v116 = vunpack.c.l.b16 %v80
    %v117 = vunpack.c.l.b16 %v81
    %v118 = vunpack.c.l.b16 %v82
    %v119 = vunpack.c.l.b16 %v83
    %v120 = vpack.c.b16 %v105, %v104
    %v121 = vpack.c.b16 %v107, %v106
    %v122 = vpack.c.b16 %v109, %v108
    %v123 = vpack.c.b16 %v111, %v110
    %v124 = vpack.c.b16 %v113, %v112
    %v125 = vpack.c.b16 %v115, %v114
    %v126 = vpack.c.b16 %v117, %v116
    %v127 = vpack.c.b16 %v119, %v118
    %136 = vmatpush.bf16.msra.mxu0 %v127
    %137 = vmatpush.bf16.msra.mxu0 %v126
    %138 = vmatpush.bf16.msra.mxu0 %v125
    %139 = vmatpush.bf16.msra.mxu0 %v124
    %140 = vmatpush.bf16.msra.mxu0 %v123
    %141 = vmatpush.bf16.msra.mxu0 %v122
    %142 = vmatpush.bf16.msra.mxu0 %v121
    %143 = vmatpush.bf16.msra.mxu0 %v120
    %144 = vmatmul.bf16.gmra.mxu0 %v67
    %v145 = vpop.f32.mrf.mxu0
    %v146 = vadd.f32 %v86, %v145
    %v147 = vpop.f32.mrf.mxu0
    %148 = vdwg.mxu0
    %v149 = vmax.f32 %v146, 0.0
    %v150 = vpack.c.bf16 %v149, %v149
    %v151 = vld [vmem:[#allocation7] sm:$0xf]
    %v152 = vld [vmem:[#allocation7 + $0x4] sm:$0xf]
    %v153 = vld [vmem:[#allocation7 + $0x8] sm:$0xf]
    %v154 = vld [vmem:[#allocation7 + $0xc] sm:$0xf]
    %v155 = vld [vmem:[#allocation7 + $0x10] sm:$0xf]
    %v156 = vld [vmem:[#allocation7 + $0x14] sm:$0xf]
    %v157 = vld [vmem:[#allocation7 + $0x18] sm:$0xf]
    %v158 = vld [vmem:[#allocation7 + $0x1c] sm:$0xf]
    %v159 = vld [vmem:[#allocation7 + $0x20] sm:$0xf]
    %v160 = vld [vmem:[#allocation7 + $0x24] sm:$0xf]
    %v161 = vld [vmem:[#allocation7 + $0x28] sm:$0xf]
    %v162 = vld [vmem:[#allocation7 + $0x2c] sm:$0xf]
    %v163 = vld [vmem:[#allocation7 + $0x30] sm:$0xf]
    %v164 = vld [vmem:[#allocation7 + $0x34] sm:$0xf]
    %v165 = vld [vmem:[#allocation7 + $0x38] sm:$0xf]
    %v166 = vld [vmem:[#allocation7 + $0x3c] sm:$0xf]
    %v167 = vld [vmem:[%s4] sm:$0x1]
    %v169 = vperm.slane %v167, 0
    %v187 = vunpack.c.l.b16 %v151
    %v188 = vunpack.c.l.b16 %v152
    %v189 = vunpack.c.l.b16 %v153
    %v190 = vunpack.c.l.b16 %v154
    %v191 = vunpack.c.l.b16 %v155
    %v192 = vunpack.c.l.b16 %v156
    %v193 = vunpack.c.l.b16 %v157
    %v194 = vunpack.c.l.b16 %v158
    %v195 = vunpack.c.l.b16 %v159
    %v196 = vunpack.c.l.b16 %v160
    %v197 = vunpack.c.l.b16 %v161
    %v198 = vunpack.c.l.b16 %v162
    %v199 = vunpack.c.l.b16 %v163
    %v200 = vunpack.c.l.b16 %v164
    %v201 = vunpack.c.l.b16 %v165
    %v202 = vunpack.c.l.b16 %v166
    %v203 = vpack.c.b16 %v188, %v187
    %v204 = vpack.c.b16 %v190, %v189
    %v205 = vpack.c.b16 %v192, %v191
    %v206 = vpack.c.b16 %v194, %v193
    %v207 = vpack.c.b16 %v196, %v195
    %v208 = vpack.c.b16 %v198, %v197
    %v209 = vpack.c.b16 %v200, %v199
    %v210 = vpack.c.b16 %v202, %v201
    %219 = vmatpush.bf16.msra.mxu0 %v210
    %220 = vmatpush.bf16.msra.mxu0 %v209
    %221 = vmatpush.bf16.msra.mxu0 %v208
    %222 = vmatpush.bf16.msra.mxu0 %v207
    %223 = vmatpush.bf16.msra.mxu0 %v206
    %224 = vmatpush.bf16.msra.mxu0 %v205
    %225 = vmatpush.bf16.msra.mxu0 %v204
    %226 = vmatpush.bf16.msra.mxu0 %v203
    %227 = vmatmul.bf16.gmra.mxu0 %v150
    %v228 = vpop.f32.mrf.mxu0
    %v229 = vadd.f32 %v169, %v228
    %v230 = vpop.f32.mrf.mxu0
    %231 = vdwg.mxu0
    %232 = vmax.xlane.f32.xlu0 %v229
    %v233 = vpop.xlane.xlu0 %232
    %v234 = vsub.f32 %v229, %v233
    %v235 = vmul.f32 %v234, 1.442695
    %v236 = vpow.pop %v235
    %237 = vadd.xlane.f32.xlu0 %v236
    %v238 = vpop.xlane.xlu0 %237
    %v239 = vrcp.pop %v238
    %v240 = vmul.f32 %v238, %v239
    %v241 = vsub.f32 1.0, %v240
    %v242 = vmul.f32 %v239, %v241
    %v243 = vadd.f32 %v239, %v242
    %vm244 = vweird.f32 %v238
    %vm245 = vweird.f32 %v239
    %vm246 = vmor %vm244, %vm245
    %v247 = vsel %vm246, %v239, %v243
    %v248 = vand.u32 2147483647, %v238
    %vm249 = vcmp.eq.f32.partialorder %v248, 8.507059e+37
    %v250 = vand.u32 %v238, 2147483648
    %v251 = vor.u32 1.1754944e-38, %v250
    %v252 = vsel %vm249, %v251, %v247
    %v253 = vmul.f32 %v236, %v252
    %254 = vst [vmem:[#allocation8] sm:$0xff] %v253
    // Predicated region
    $region34: #{tpu_custom_call.1} parent=1 // pred_check
      _
    $region35: #{tpu_custom_call.1} parent=1 // pred_check_branch
      %256 = sbr.rel (0) target = $region37
    $region36: #{tpu_custom_call.1} parent=1 // pred_region
      %258 = vsyncadd [#allocation4], 0
      %s260 = sshll.u32 [#allocation8], 4
      %s261 = int_to_ptr.vmem [resolvable:$true] %s260
      %s262 = sshll.u32 %s5, 4
      %s263 = int_to_ptr.hbm [resolvable:$true] %s262
      %265 = dma.vmem_to_hbm [thread:$0]  %s261, 128, %s263, [#allocation4]
    $region37: #{tpu_custom_call.1} parent=1 // pred_fallthru
      _
    // Predicated region
    $region38: #{tpu_custom_call.1} parent=1 // pred_check
      _
    $region39: #{tpu_custom_call.1} parent=1 // pred_check_branch
      %267 = sbr.rel (0) target = $region41
    $region40: #{tpu_custom_call.1} parent=1 // pred_region
      %269 = dma.done [#allocation4], 128
    $region41: #{tpu_custom_call.1} parent=1 // pred_fallthru
      _
    %270 = vsyncpa [#allocation3], 1
    %271 = vsyncpa [#allocation6], 1
    %272 = vsyncpa [#allocation4], 1

</llo_original>
